<compile_context>
chip_gen: v6e
topology: v6e:2x2x1
jax: 0.10.0
libtpu: 0.0.40
codegen_flags: <defaults>
</compile_context>

<pallas_src>
import jax
import jax.numpy as jnp
from jax.experimental import pallas as pl
from jax.experimental.pallas import tpu as pltpu


def _rbf_kernel(x_ref, u_ref, ip2_ref, sel_ref, o_ref):
    # x_ref:   (TN, Dp)   packed rows of x (pack rows of the original x per row)
    # u_ref:   (1, Dp)    u tiled `pack` times along lanes
    # ip2_ref: (1, Dp)    1/precision^2 tiled `pack` times along lanes
    # sel_ref: (Dp, pack) block-diagonal selector (segmented-sum matrix)
    # o_ref:   (TN, pack)
    x = x_ref[...].astype(jnp.float32)
    u = u_ref[...]
    ip2 = ip2_ref[...]

    d = x - u                                    # broadcast over rows (VPU)
    z = (d * d) * ip2                            # (TN, Dp), no divides in-kernel
    # Segmented reduction over each group of D lanes -> MXU (frees VPU/XLU).
    s = jnp.dot(z, sel_ref[...], preferred_element_type=jnp.float32)  # (TN, pack)
    o_ref[...] = jnp.exp(-0.5 * s).astype(o_ref.dtype)


def _round_up(a, m):
    return ((a + m - 1) // m) * m


def radial_basis_function(x, u, precision, *, row_tile=512):
    """x: (N, dims); u, precision: (1, dims). Returns (N,) float32."""
    N, D = x.shape
    assert u.shape == (1, D) and precision.shape == (1, D)

    # Exact reciprocal of precision^2, computed once on the (1, D) parameter
    # (keeps the per-element math divide-free but bit-accurate vs. reference).
    inv_p2 = 1.0 / (precision.astype(jnp.float32) ** 2)
    u32 = u.astype(jnp.float32)

    # Lane packing for small D: pack `pack` rows of x into one 128-lane row.
    if D < 128 and 128 % D == 0:
        pack = 128 // D
    else:
        pack = 1
    Dp = pack * D

    # Pad N so rows pack evenly, then reshape (N, D) -> (rows, Dp).
    rows = -(-N // pack)
    pad_rows_in = rows * pack - N
    xp = x
    if pad_rows_in:
        xp = jnp.concatenate([xp, jnp.zeros((pad_rows_in, D), xp.dtype)], axis=0)
    xp = xp.reshape(rows, Dp)

    # Tile parameters across the packed lane groups.
    u_t = jnp.tile(u32, (1, pack))          # (1, Dp)
    ip2_t = jnp.tile(inv_p2, (1, pack))     # (1, Dp)

    # Block-diagonal selector: lane l contributes to output group l // D.
    lane = jax.lax.broadcasted_iota(jnp.int32, (Dp, pack), 0)
    grp = jax.lax.broadcasted_iota(jnp.int32, (Dp, pack), 1)
    sel = (lane // D == grp).astype(jnp.float32)

    # Row-tile sizing: big tiles to amortize ~0.35us/step overhead, but cap the
    # x block at ~4 MiB so double-buffering stays inside the default scoped
    # VMEM budget on every generation (incl. v7x's 64 MiB physical VMEM).
    bytes_per_packed_row = Dp * jnp.dtype(xp.dtype).itemsize
    max_rows_by_vmem = max(8, ((4 * 1024 * 1024) // bytes_per_packed_row) // 8 * 8)
    rt = min(int(row_tile), int(max_rows_by_vmem), _round_up(rows, 8))
    rt = max(8, (rt // 8) * 8)

    rows_padded = _round_up(rows, rt)
    if rows_padded != rows:
        xp = jnp.concatenate(
            [xp, jnp.zeros((rows_padded - rows, Dp), xp.dtype)], axis=0
        )

    grid = (rows_padded // rt,)
    out = pl.pallas_call(
        _rbf_kernel,
        out_shape=jax.ShapeDtypeStruct((rows_padded, pack), jnp.float32),
        grid_spec=pltpu.PrefetchScalarGridSpec(
            num_scalar_prefetch=0,
            grid=grid,
            in_specs=[
                pl.BlockSpec((rt, Dp), lambda i: (i, 0)),    # packed x rows
                pl.BlockSpec((1, Dp), lambda i: (0, 0)),     # u (broadcast)
                pl.BlockSpec((1, Dp), lambda i: (0, 0)),     # 1/precision^2
                pl.BlockSpec((Dp, pack), lambda i: (0, 0)),  # selector
            ],
            out_specs=pl.BlockSpec((rt, pack), lambda i: (i, 0)),
        ),
        compiler_params=pltpu.CompilerParams(
            dimension_semantics=("parallel",),
        ),
    )(xp, u_t, ip2_t, sel)

    # (rows_padded, pack) row-major == original row order; drop the padding.
    return out.reshape(rows_padded * pack)[:N]


def _reference(x, u, precision):
    diff = (x.astype(jnp.float32) - u) ** 2
    xpx = diff / (precision ** 2)
    return jnp.exp(-0.5 * jnp.sum(xpx, axis=1))


if __name__ == "__main__":
    dims = 32
    N = 16

    key = jax.random.PRNGKey(0)
    kx, ku, kp = jax.random.split(key, 3)

    # Deterministic "parameter" init matching nn.Parameter(...).normal_(0, 1)
    u = jax.random.normal(ku, (1, dims), dtype=jnp.float32)
    precision = jax.random.normal(kp, (1, dims), dtype=jnp.float32)
    x = jax.random.normal(kx, (N, dims), dtype=jnp.float32)

    y = radial_basis_function(x, u, precision)
    y = jax.block_until_ready(y)

    y_ref = _reference(x, u, precision)
    assert y.shape == (N,)
    assert jnp.allclose(y, y_ref, atol=1e-5, rtol=1e-5), "mismatch vs reference"

    print("KERNEL_OK")
</pallas_src>

<mosaic_0001>
module attributes {stable_mosaic.version = 11 : i64} {
  func.func @_rbf_kernel(%arg0: i32, %arg1: memref<8x128xf32, #tpu.memory_space<vmem>>, %arg2: memref<1x128xf32, #tpu.memory_space<vmem>>, %arg3: memref<1x128xf32, #tpu.memory_space<vmem>>, %arg4: memref<128x4xf32, #tpu.memory_space<vmem>>, %arg5: memref<8x4xf32, #tpu.memory_space<vmem>>) attributes {dimension_semantics = [#tpu.dimension_semantics<parallel>], iteration_bounds = array<i64: 1>, scalar_prefetch = 0 : i64, scratch_operands = 0 : i64, tpu.core_type = #tpu.core_type<tc>, window_params = [{transform_indices = @transform_0, window_bounds = array<i64: 8, 128>}, {pipeline_mode = #tpu.pipeline_mode<synchronous>, transform_indices = @transform_1, window_bounds = array<i64: 1, 128>}, {pipeline_mode = #tpu.pipeline_mode<synchronous>, transform_indices = @transform_2, window_bounds = array<i64: 1, 128>}, {pipeline_mode = #tpu.pipeline_mode<synchronous>, transform_indices = @transform_3, window_bounds = array<i64: 128, 4>}, {transform_indices = @transform_4, window_bounds = array<i64: 8, 4>}]} {
    %c0 = arith.constant 0 : index
    %c0_0 = arith.constant 0 : index
    %0 = vector.load %arg1[%c0, %c0_0] : memref<8x128xf32, #tpu.memory_space<vmem>>, vector<8x128xf32>
    %c0_1 = arith.constant 0 : index
    %c0_2 = arith.constant 0 : index
    %1 = vector.load %arg2[%c0_1, %c0_2] : memref<1x128xf32, #tpu.memory_space<vmem>>, vector<1x128xf32>
    %c0_3 = arith.constant 0 : index
    %c0_4 = arith.constant 0 : index
    %2 = vector.load %arg3[%c0_3, %c0_4] : memref<1x128xf32, #tpu.memory_space<vmem>>, vector<1x128xf32>
    %3 = vector.broadcast %1 : vector<1x128xf32> to vector<8x128xf32>
    %4 = arith.subf %0, %3 : vector<8x128xf32>
    %5 = arith.mulf %4, %4 : vector<8x128xf32>
    %6 = vector.broadcast %2 : vector<1x128xf32> to vector<8x128xf32>
    %7 = arith.mulf %5, %6 : vector<8x128xf32>
    %c0_5 = arith.constant 0 : index
    %c0_6 = arith.constant 0 : index
    %8 = vector.load %arg4[%c0_5, %c0_6] : memref<128x4xf32, #tpu.memory_space<vmem>>, vector<128x4xf32>
    %cst = arith.constant dense<0.000000e+00> : vector<8x4xf32>
    %9 = tpu.matmul %7, %8, %cst {dimension_numbers = #tpu.dot_dimension_numbers<[1], [0], [0], [1], [0, 0, 1, 1], [], []>} : vector<8x128xf32>, vector<128x4xf32>, vector<8x4xf32> -> vector<8x4xf32>
    %cst_7 = arith.constant -5.000000e-01 : f32
    %10 = vector.broadcast %cst_7 : f32 to vector<8x4xf32>
    %11 = arith.mulf %10, %9 : vector<8x4xf32>
    %12 = math.exp %11 : vector<8x4xf32>
    %c0_8 = arith.constant 0 : index
    %c0_9 = arith.constant 0 : index
    %13 = vector.load %arg5[%c0_8, %c0_9] : memref<8x4xf32, #tpu.memory_space<vmem>>, vector<8x4xf32>
    tpu.vector_store %arg5[%c0_8, %c0_9], %12 {strides = array<i32>} : memref<8x4xf32, #tpu.memory_space<vmem>>, vector<8x4xf32>,
    return
  }
  func.func @transform_0(%arg0: i32) -> (i32, i32) {
    %c0_i32 = arith.constant 0 : i32
    %c0_i32_0 = arith.constant 0 : i32
    return %arg0, %c0_i32 : i32, i32
  }
  func.func @transform_1(%arg0: i32) -> (i32, i32) {
    %c0_i32 = arith.constant 0 : i32
    %c0_i32_0 = arith.constant 0 : i32
    %c0_i32_1 = arith.constant 0 : i32
    return %c0_i32, %c0_i32_0 : i32, i32
  }
  func.func @transform_2(%arg0: i32) -> (i32, i32) {
    %c0_i32 = arith.constant 0 : i32
    %c0_i32_0 = arith.constant 0 : i32
    %c0_i32_1 = arith.constant 0 : i32
    return %c0_i32, %c0_i32_0 : i32, i32
  }
  func.func @transform_3(%arg0: i32) -> (i32, i32) {
    %c0_i32 = arith.constant 0 : i32
    %c0_i32_0 = arith.constant 0 : i32
    %c0_i32_1 = arith.constant 0 : i32
    return %c0_i32, %c0_i32_0 : i32, i32
  }
  func.func @transform_4(%arg0: i32) -> (i32, i32) {
    %c0_i32 = arith.constant 0 : i32
    %c0_i32_0 = arith.constant 0 : i32
    return %arg0, %c0_i32 : i32, i32
  }
}

</mosaic_0001>

<llo_original>
// kernel: tpu_custom_call.1
$region0: #{tpu_custom_call.1}
  #allocation0 [shape = 'u32[]', space=smem, size = 0x4, offset = 0x4, fixed_abs, tag = 'smem constant byte address 0x4 - core index']
  #allocation1 [shape = 'u32[144,128]{1,0:T(1,128)}', space=vmem, size = 0x12000, scoped, tag = 'internal scratch']
  %s0 = inlined_call_operand.vmem [shape: f32[8,128], index: 0, kind: input, shape index: {}]
  %s1 = inlined_call_operand.vmem [shape: f32[1,128], index: 1, kind: input, shape index: {}]
  %s2 = inlined_call_operand.vmem [shape: f32[1,128], index: 2, kind: input, shape index: {}]
  %s3 = inlined_call_operand.vmem [shape: f32[128,4], index: 3, kind: input, shape index: {}]
  %s4 = inlined_call_operand.vmem [shape: f32[8,4], index: 4, kind: output, shape index: {}]
  %s5 = sld [smem:[#allocation0]]
  $region26: #{tpu_custom_call.1} parent=0
    _
  %s7 = ssub.s32 1, %s5
  %s8 = scalar_select 0, %s7, %s5
  // Predicated region
  $region2: #{tpu_custom_call.1} parent=0 // pred_check
    _
  $region3: #{tpu_custom_call.1} parent=0 // pred_check_branch
    %10 = sbr.rel (0) target = $region5
  $region4: #{tpu_custom_call.1} parent=0 // pred_region
    _
  $region5: #{tpu_custom_call.1} parent=0 // pred_fallthru
    _
  // Predicated region
  $region6: #{tpu_custom_call.1} parent=0 // pred_check
    _
  $region7: #{tpu_custom_call.1} parent=0 // pred_check_branch
    %12 = sbr.rel (0) target = $region9
  $region8: #{tpu_custom_call.1} parent=0 // pred_region
    _
  $region9: #{tpu_custom_call.1} parent=0 // pred_fallthru
    _
  // Predicated region
  $region10: #{tpu_custom_call.1} parent=0 // pred_check
    _
  $region11: #{tpu_custom_call.1} parent=0 // pred_check_branch
    %14 = sbr.rel (0) target = $region13
  $region12: #{tpu_custom_call.1} parent=0 // pred_region
    _
  $region13: #{tpu_custom_call.1} parent=0 // pred_fallthru
    _
  // Predicated region
  $region14: #{tpu_custom_call.1} parent=0 // pred_check
    _
  $region15: #{tpu_custom_call.1} parent=0 // pred_check_branch
    %16 = sbr.rel (0) target = $region17
  $region16: #{tpu_custom_call.1} parent=0 // pred_region
    _
  $region17: #{tpu_custom_call.1} parent=0 // pred_fallthru
    _
  %v17 = vld [vmem:[%s0] sm:$0xff]
  %v18 = vld [vmem:[%s1] sm:$0x1]
  %v19 = vld [vmem:[%s2] sm:$0x1]
  %v21 = vlaneseq
  %v22 = vshrl.u32 %v21, 7
  %v23 = vsub.s32 0, %v22
  %v24 = vrot.slane %v18, %v23
  %v26 = vsub.f32 %v17, %v24
  %v27 = vmul.f32 %v26, %v26
  %v29 = vlaneseq
  %v30 = vshrl.u32 %v29, 7
  %v31 = vsub.s32 0, %v30
  %v32 = vrot.slane %v19, %v31
  %v34 = vmul.f32 %v27, %v32
  %v35 = vld [vmem:[%s3] sm:$0xff]
  %v36 = vld [vmem:[%s3 + $0x8] sm:$0xff]
  %v37 = vld [vmem:[%s3 + $0x10] sm:$0xff]
  %v38 = vld [vmem:[%s3 + $0x18] sm:$0xff]
  %v39 = vld [vmem:[%s3 + $0x20] sm:$0xff]
  %v40 = vld [vmem:[%s3 + $0x28] sm:$0xff]
  %v41 = vld [vmem:[%s3 + $0x30] sm:$0xff]
  %v42 = vld [vmem:[%s3 + $0x38] sm:$0xff]
  %v43 = vld [vmem:[%s3 + $0x40] sm:$0xff]
  %v44 = vld [vmem:[%s3 + $0x48] sm:$0xff]
  %v45 = vld [vmem:[%s3 + $0x50] sm:$0xff]
  %v46 = vld [vmem:[%s3 + $0x58] sm:$0xff]
  %v47 = vld [vmem:[%s3 + $0x60] sm:$0xff]
  %v48 = vld [vmem:[%s3 + $0x68] sm:$0xff]
  %v49 = vld [vmem:[%s3 + $0x70] sm:$0xff]
  %v50 = vld [vmem:[%s3 + $0x78] sm:$0xff]
  %51 = vmatprep.subr.mxu0 0.0
  %52 = vmatpush1.msra.mxu0 %v50
  %53 = vmatprep.subr.mxu0 0.0
  %54 = vmatpush1.msra.mxu0 %v49
  %55 = vmatprep.subr.mxu0 0.0
  %56 = vmatpush1.msra.mxu0 %v48
  %57 = vmatprep.subr.mxu0 0.0
  %58 = vmatpush1.msra.mxu0 %v47
  %59 = vmatprep.subr.mxu0 0.0
  %60 = vmatpush1.msra.mxu0 %v46
  %61 = vmatprep.subr.mxu0 0.0
  %62 = vmatpush1.msra.mxu0 %v45
  %63 = vmatprep.subr.mxu0 0.0
  %64 = vmatpush1.msra.mxu0 %v44
  %65 = vmatprep.subr.mxu0 0.0
  %66 = vmatpush1.msra.mxu0 %v43
  %67 = vmatprep.subr.mxu0 0.0
  %68 = vmatpush1.msra.mxu0 %v42
  %69 = vmatprep.subr.mxu0 0.0
  %70 = vmatpush1.msra.mxu0 %v41
  %71 = vmatprep.subr.mxu0 0.0
  %72 = vmatpush1.msra.mxu0 %v40
  %73 = vmatprep.subr.mxu0 0.0
  %74 = vmatpush1.msra.mxu0 %v39
  %75 = vmatprep.subr.mxu0 0.0
  %76 = vmatpush1.msra.mxu0 %v38
  %77 = vmatprep.subr.mxu0 0.0
  %78 = vmatpush1.msra.mxu0 %v37
  %79 = vmatprep.subr.mxu0 0.0
  %80 = vmatpush1.msra.mxu0 %v36
  %81 = vmatprep.subr.mxu0 0.0
  %82 = vmatpush1.msra.mxu0 %v35
  %83 = vmatprep.subr.mxu0 0.0
  %84 = vmatpush2.msra.mxu0 0.0
  %85 = vmatprep.subr.mxu0 0.0
  %86 = vmatpush2.msra.mxu0 0.0
  %87 = vmatprep.subr.mxu0 0.0
  %88 = vmatpush2.msra.mxu0 0.0
  %89 = vmatprep.subr.mxu0 0.0
  %90 = vmatpush2.msra.mxu0 0.0
  %91 = vmatprep.subr.mxu0 0.0
  %92 = vmatpush2.msra.mxu0 0.0
  %93 = vmatprep.subr.mxu0 0.0
  %94 = vmatpush2.msra.mxu0 0.0
  %95 = vmatprep.subr.mxu0 0.0
  %96 = vmatpush2.msra.mxu0 0.0
  %97 = vmatprep.subr.mxu0 0.0
  %98 = vmatpush2.msra.mxu0 0.0
  %99 = vmatprep.subr.mxu0 0.0
  %100 = vmatpush2.msra.mxu0 0.0
  %101 = vmatprep.subr.mxu0 0.0
  %102 = vmatpush2.msra.mxu0 0.0
  %103 = vmatprep.subr.mxu0 0.0
  %104 = vmatpush2.msra.mxu0 0.0
  %105 = vmatprep.subr.mxu0 0.0
  %106 = vmatpush2.msra.mxu0 0.0
  %107 = vmatprep.subr.mxu0 0.0
  %108 = vmatpush2.msra.mxu0 0.0
  %109 = vmatprep.subr.mxu0 0.0
  %110 = vmatpush2.msra.mxu0 0.0
  %111 = vmatprep.subr.mxu0 0.0
  %112 = vmatpush2.msra.mxu0 0.0
  %113 = vmatprep.subr.mxu0 0.0
  %114 = vmatpush2.msra.mxu0 0.0
  %115 = vmatprep.mubr.f32.mxu0 0.0
  %116 = vmatmul.mubr.f32.gmra.mxu0 %v34
  %v117 = vpop.f32.mrf.mxu0
  %v118 = vadd.f32 0.0, %v117
  %v119 = vpop.f32.mrf.mxu0
  %120 = vdwg.mxu0
  %v121 = vmul.f32 %v118, -0.5
  %v122 = vmul.f32 %v121, 1.442695
  %v123 = vpow.pop %v122
  %vm124 = vcmask 31744
  %125 = vst.msk [vmem:[%s4] sm:$0xff] %vm124, %v123
  // Predicated region
  $region18: #{tpu_custom_call.1} parent=0 // pred_check
    _
  $region19: #{tpu_custom_call.1} parent=0 // pred_check_branch
    %127 = sbr.rel (0) target = $region21
  $region20: #{tpu_custom_call.1} parent=0 // pred_region
    _
  $region21: #{tpu_custom_call.1} parent=0 // pred_fallthru
    _
  // Predicated region
  $region22: #{tpu_custom_call.1} parent=0 // pred_check
    _
  $region23: #{tpu_custom_call.1} parent=0 // pred_check_branch
    %129 = sbr.rel (0) target = $region25
  $region24: #{tpu_custom_call.1} parent=0 // pred_region
    _
  $region25: #{tpu_custom_call.1} parent=0 // pred_fallthru
    _

</llo_original>
